<compile_context>
chip_gen: v7x
topology: tpu7x:2x2x1
jax: 0.10.0
libtpu: 0.0.40
codegen_flags: <defaults>
</compile_context>

<pallas_src>
import functools

import jax
import jax.numpy as jnp
from jax import lax
from jax.experimental import pallas as pl
from jax.experimental.pallas import tpu as pltpu

_LANE = 128


# ----------------------------------------------------------------------------
# Pallas kernel
# ----------------------------------------------------------------------------
def _wl2_kernel(x_ref, o_ref, *, hw, hw_tile, masked_tail):
    # grid = (B, T//T_blk, n_hw): axis 0 = batch (parallel), axes 1/2 = reduction.
    t = pl.program_id(1)
    s = pl.program_id(2)

    @pl.when(jnp.logical_and(t == 0, s == 0))
    def _init():
        o_ref[...] = jnp.zeros_like(o_ref)

    xb = x_ref[0].astype(jnp.float32)                 # (T_blk, V, hw_tile), lane-dense
    sq = jnp.where(jnp.isnan(xb), 0.0, xb * xb)       # torch.nansum(x**2) semantics

    if masked_tail:
        # Last HW tile extends past the array; zero the padded lanes.
        col = lax.broadcasted_iota(jnp.int32, (1, 1, hw_tile), 2)
        sq = jnp.where(col < (hw - s * hw_tile), sq, 0.0)

    # Per-lane VALU adds over T_blk, one cross-lane reduce per grid step,
    # accumulated directly into the resident output block (f32).
    o_ref[...] += jnp.sum(sq, axis=(0, 2), keepdims=True)


# ----------------------------------------------------------------------------
# Tiling helpers
# ----------------------------------------------------------------------------
def _vmem_budget_bytes():
    """Per-input-buffer byte budget (double-buffered by the pipeline)."""
    try:
        cap = pltpu.get_tpu_info().vmem_capacity_bytes
    except Exception:  # pragma: no cover - conservative fallback (v7x physical)
        cap = 64 * 1024 * 1024
    return int(min(cap // 8, 8 * 1024 * 1024))


def _largest_lane_divisor(n, cap):
    d = (min(n, cap) // _LANE) * _LANE
    while d >= _LANE:
        if n % d == 0:
            return d
        d -= _LANE
    return 0


def _choose_tiling(T, V, HW, itemsize, budget):
    """Pick (t_blk, hw_tile, n_hw, masked_tail) within the VMEM budget."""
    max_hw = max(_LANE, (budget // (V * itemsize) // _LANE) * _LANE)
    if HW % _LANE == 0:
        cap = min(HW, max_hw)
        d = _largest_lane_divisor(HW, cap)
        # Prefer an exact divisor unless it wastes more than half the budget.
        hw_tile = d if d >= cap // 2 else cap
    elif V * HW * itemsize <= budget:
        hw_tile = HW                       # full-dim block satisfies the lane rule
    else:
        hw_tile = max_hw                   # 128-multiple tiles + masked tail
    n_hw = -(-HW // hw_tile)
    masked_tail = (n_hw * hw_tile != HW)

    slab = V * hw_tile * itemsize          # bytes per single-T slab
    t_blk = int(max(1, min(T, budget // max(slab, 1))))
    while T % t_blk != 0:                  # keep T_blk an exact divisor of T
        t_blk -= 1
    return t_blk, hw_tile, n_hw, masked_tail


# ----------------------------------------------------------------------------
# Module wrapper
# ----------------------------------------------------------------------------
def make_r_inv(obserr):
    """Mirror Model_WeightedL2Norm.__init__: R_inv = 1 / obserr**2 (0 where obserr == 0)."""
    obserr = jnp.asarray(obserr, jnp.float32).reshape(1, -1)
    obserr2 = obserr ** 2
    return jnp.where(obserr2 == 0, 0.0, 1.0 / obserr2)


def weighted_l2_norm(x, std, r_inv):
    """x: (B, T, V, H, W); std: (V,); r_inv: (1, V). Returns (loss, [7 group losses])."""
    B, T, V, H, W = x.shape
    HW = H * W
    itemsize = jnp.dtype(x.dtype).itemsize

    budget = _vmem_budget_bytes()
    t_blk, hw_tile, n_hw, masked_tail = _choose_tiling(T, V, HW, itemsize, budget)
    n_t = T // t_blk

    # Row-major reshape: free, makes the reduced axis lane-dense.
    xr = x.reshape(B, T, V, HW)

    kernel = functools.partial(
        _wl2_kernel, hw=HW, hw_tile=hw_tile, masked_tail=masked_tail
    )

    sums = pl.pallas_call(
        kernel,
        out_shape=jax.ShapeDtypeStruct((B, V, 1), jnp.float32),
        grid=(B, n_t, n_hw),
        in_specs=[
            pl.BlockSpec((1, t_blk, V, hw_tile), lambda b, t, s: (b, t, 0, s)),
        ],
        out_specs=pl.BlockSpec((1, V, 1), lambda b, t, s: (b, 0, 0)),
        compiler_params=pltpu.CompilerParams(
            dimension_semantics=("parallel", "arbitrary", "arbitrary"),
            vmem_limit_bytes=32 * 1024 * 1024,
        ),
    )(xr)

    # Tiny finalization on B*V floats in plain JAX (scale fold + group sums).
    L = sums[..., 0]                                           # (B, V) raw sum of squares
    var = jnp.asarray(std, jnp.float32).reshape(V) ** 2
    scale = jnp.asarray(r_inv, jnp.float32).reshape(V) * var / jnp.float32(T * B)
    Lw = L * scale[None, :]                                    # weighted, T-mean & /B folded in

    loss = jnp.sum(Lw)
    groups = [
        jnp.sum(Lw[:, a:b])
        for a, b in ((0, 4), (4, 8), (8, 12), (12, 20), (20, 22), (22, 23), (23, 24))
    ]
    return loss, groups


# ----------------------------------------------------------------------------
# Pure-jnp reference (mirrors the PyTorch forward exactly)
# ----------------------------------------------------------------------------
def reference_weighted_l2_norm(x, std, r_inv):
    B = x.shape[0]
    var = jnp.asarray(std, x.dtype)[None, :] ** 2
    loss = jnp.nansum(x ** 2, axis=(-2, -1))     # (B, T, V)
    loss = jnp.nanmean(loss, axis=1)             # (B, V)
    loss = loss * r_inv.reshape(1, -1) * var     # (B, V)
    total = jnp.nansum(loss) / B
    groups = [
        jnp.nansum(loss[:, a:b]) / B
        for a, b in ((0, 4), (4, 8), (8, 12), (12, 20), (20, 22), (22, 23), (23, 24))
    ]
    return total, groups


if __name__ == "__main__":
    # Small shapes consistent with the module: x = (B, T, num_vars, H, W),
    # num_vars = 24 (the forward slices variables up to index 24).
    B, T, V, H, W = 2, 2, 24, 16, 16

    key = jax.random.PRNGKey(0)
    x = jax.random.normal(key, (B, T, V, H, W), dtype=jnp.float32)
    # Inject NaNs to exercise the nansum / nanmean semantics.
    x = x.at[0, 0, 3, 2, :5].set(jnp.nan)
    x = x.at[1, 1, 7, :, 0].set(jnp.nan)

    obserr = 0.1 + 0.05 * jnp.arange(V, dtype=jnp.float32)
    obserr = obserr.at[5].set(0.0)  # exercise the obserr == 0 -> R_inv = 0 branch
    std = 0.5 + 0.05 * jnp.arange(V, dtype=jnp.float32)

    r_inv = make_r_inv(obserr)

    loss, parts = weighted_l2_norm(x, std, r_inv)
    loss = jax.block_until_ready(loss)

    ref_loss, ref_parts = reference_weighted_l2_norm(x, std, r_inv)

    assert not bool(jnp.isnan(loss)), "loss is NaN"
    assert jnp.allclose(loss, ref_loss, rtol=1e-4, atol=1e-3), (loss, ref_loss)
    for got, want in zip(parts, ref_parts):
        assert jnp.allclose(got, want, rtol=1e-4, atol=1e-3), (got, want)

    print("KERNEL_OK")
</pallas_src>

<mosaic_0001>
module attributes {stable_mosaic.version = 11 : i64} {
  func.func @_wl2_kernel(%arg0: i32, %arg1: i32, %arg2: i32, %arg3: memref<1x2x24x256xf32, #tpu.memory_space<vmem>>, %arg4: memref<1x24x1xf32, #tpu.memory_space<vmem>>) attributes {dimension_semantics = [#tpu.dimension_semantics<parallel>, #tpu.dimension_semantics<arbitrary>, #tpu.dimension_semantics<arbitrary>], iteration_bounds = array<i64: 2, 1, 1>, scalar_prefetch = 0 : i64, scratch_operands = 0 : i64, tpu.core_type = #tpu.core_type<tc>, window_params = [{transform_indices = @transform_0, window_bounds = array<i64: 1, 2, 24, 256>}, {transform_indices = @transform_1, window_bounds = array<i64: 1, 24, 1>}]} {
    %c0_i32 = arith.constant 0 : i32
    %0 = arith.cmpi eq, %arg1, %c0_i32 : i32
    %c0_i32_0 = arith.constant 0 : i32
    %1 = arith.cmpi eq, %arg2, %c0_i32_0 : i32
    %2 = arith.andi %0, %1 : i1
    %3 = arith.extui %2 : i1 to i32
    %c0_i32_1 = arith.constant 0 : i32
    %4 = arith.cmpi ne, %3, %c0_i32_1 : i32
    scf.if %4 {
      %cst_12 = arith.constant 0.000000e+00 : f32
      %16 = vector.broadcast %cst_12 : f32 to vector<1x24x1xf32>
      %c0_13 = arith.constant 0 : index
      %c0_14 = arith.constant 0 : index
      %c0_15 = arith.constant 0 : index
      %17 = vector.load %arg4[%c0_13, %c0_14, %c0_15] : memref<1x24x1xf32, #tpu.memory_space<vmem>>, vector<1x24x1xf32>
      tpu.vector_store %arg4[%c0_13, %c0_14, %c0_15], %16 {strides = array<i32>} : memref<1x24x1xf32, #tpu.memory_space<vmem>>, vector<1x24x1xf32>,
    } else {
    }
    %c0 = arith.constant 0 : index
    %c0_2 = arith.constant 0 : index
    %c0_3 = arith.constant 0 : index
    %c0_4 = arith.constant 0 : index
    %5 = vector.load %arg3[%c0, %c0_2, %c0_3, %c0_4] : memref<1x2x24x256xf32, #tpu.memory_space<vmem>>, vector<1x2x24x256xf32>
    %6 = vector.shape_cast %5 : vector<1x2x24x256xf32> to vector<2x24x256xf32>
    %7 = arith.cmpf one, %6, %6 : vector<2x24x256xf32>
    %8 = arith.mulf %6, %6 : vector<2x24x256xf32>
    %cst = arith.constant 0.000000e+00 : f32
    %9 = vector.broadcast %cst : f32 to vector<2x24x256xf32>
    %10 = arith.select %7, %9, %8 : vector<2x24x256xi1>, vector<2x24x256xf32>
    %c0_5 = arith.constant 0 : index
    %c0_6 = arith.constant 0 : index
    %c0_7 = arith.constant 0 : index
    %11 = vector.load %arg4[%c0_5, %c0_6, %c0_7] : memref<1x24x1xf32, #tpu.memory_space<vmem>>, vector<1x24x1xf32>
    %cst_8 = arith.constant dense<0.000000e+00> : vector<24xf32>
    %12 = vector.multi_reduction <add>, %10, %cst_8 [0, 2] : vector<2x24x256xf32> to vector<24xf32>
    %13 = vector.shape_cast %12 : vector<24xf32> to vector<1x24x1xf32>
    %14 = arith.addf %11, %13 : vector<1x24x1xf32>
    %c0_9 = arith.constant 0 : index
    %c0_10 = arith.constant 0 : index
    %c0_11 = arith.constant 0 : index
    %15 = vector.load %arg4[%c0_9, %c0_10, %c0_11] : memref<1x24x1xf32, #tpu.memory_space<vmem>>, vector<1x24x1xf32>
    tpu.vector_store %arg4[%c0_9, %c0_10, %c0_11], %14 {strides = array<i32>} : memref<1x24x1xf32, #tpu.memory_space<vmem>>, vector<1x24x1xf32>,
    return
  }
  func.func @transform_0(%arg0: i32, %arg1: i32, %arg2: i32) -> (i32, i32, i32, i32) {
    %c0_i32 = arith.constant 0 : i32
    %c0_i32_0 = arith.constant 0 : i32
    return %arg0, %arg1, %c0_i32, %arg2 : i32, i32, i32, i32
  }
  func.func @transform_1(%arg0: i32, %arg1: i32, %arg2: i32) -> (i32, i32, i32) {
    %c0_i32 = arith.constant 0 : i32
    %c0_i32_0 = arith.constant 0 : i32
    %c0_i32_1 = arith.constant 0 : i32
    return %arg0, %c0_i32, %c0_i32_0 : i32, i32, i32
  }
}

</mosaic_0001>

<llo_original>
// kernel: tpu_custom_call.1
$region0: #{tpu_custom_call.1}
  #allocation0 [shape = 'u32[]', space=smem, size = 0x4, offset = 0x4, fixed_abs, tag = 'smem constant byte address 0x4 - core index']
  #allocation1 [shape = 'u32[144,128]{1,0:T(1,128)}', space=vmem, size = 0x12000, scoped, tag = 'internal scratch']
  %s0 = inlined_call_operand.hbm [shape: f32[2,2,24,256], index: 0, kind: input, shape index: {}]
  %s1 = inlined_call_operand.vmem [shape: f32[2,24,1], index: 1, kind: output, shape index: {}]
  %s2 = sld [smem:[#allocation0]]
  $region45: #{tpu_custom_call.1} parent=0
    _
  %s4 = ssub.s32 1, %s2
  %s5 = scalar_select 0, %s4, %s2
  $region1: #{tpu_custom_call.1} parent=0
    #allocation2 [shape = 'u8[98304]{0}', space=vmem, size = 0x18000, scoped, tag = 'input window, operand 0']
    #allocation3 [shape = 's32[2]{0}', space=sflag, size = 0x8, scoped, tag = 'scoped memory for tpu_custom_call.1']
    %6 = vsyncpa [#allocation3], 0
    %s7 = scalar_lea.sflag [#allocation3], 1
    %8 = vsyncpa %s7, 0
    loop: start=0, step=1, limit=4
    $region2: #{tpu_custom_call.1} parent=1 // loop_pre_header
      _
    $region3: #{tpu_custom_call.1} parent=1 // loop_header
      %s10 = sphi 0, %s14
      %p11 = scmp.ge.s32.totalorder %s10, 4
      %s17 = sphi 0, %s36
      %s18 = sphi 0, %s32
      %s19 = sphi 0, %s28
      %s20 = sphi 0, %s17
      %s21 = sphi 0, %s18
      %s22 = sphi 0, %s19
      %s23 = sphi 0, %s20
      %s24 = sphi 0, %s21
      %s25 = sphi 0, %s22
      %s43 = sphi 0, %s45
      %s46 = sphi 0, %s43
      %s47 = sphi 0, %s46
      %s63 = sphi 0, %s47
      %s69 = sphi 0, %s71
      %s72 = sphi 0, %s69
      %s73 = sphi 0, %s72
      %s89 = sphi 0, %s73
    $region4: #{tpu_custom_call.1} parent=1 // loop_header_branch
      %13 = sbr.rel (%p11) target = $region8
    $region5: #{tpu_custom_call.1} parent=1 // loop_body
      %s15 = ssub.s32 %s10, 1
      %s16 = ssub.s32 %s10, 2
      %s26 = sadd.s32 1, %s19
      %p27 = scmp.ge.s32.totalorder %s26, 1
      %s28 = scalar_select %p27, 0, %s26
      %s29 = sadd.s32 1, %s18
      %s30 = scalar_select %p27, %s29, %s18
      %p31 = scmp.ge.s32.totalorder %s30, 1
      %s32 = scalar_select %p31, 0, %s30
      %s33 = sadd.s32 1, %s17
      %s34 = scalar_select %p31, %s33, %s17
      %p35 = scmp.ge.s32.totalorder %s34, 2
      %s36 = scalar_select %p35, 0, %s34
      %s37 = ssub.s32 %s17, %s36
      %s38 = ssub.s32 %s18, %s32
      %s39 = sor.u32 %s37, %s38
      %s40 = ssub.s32 %s19, %s28
      %s41 = sor.u32 %s39, %s40
      %p42 = scmp.eq.s32.totalorder %s41, 0
      %s44 = sadd.s32 %s43, 1
      %s45 = scalar_select %p42, %s43, %s44
      %p48 = pneg %p42
      %p49 = scmp.eq.s32.totalorder %s10, 1
      %p50 = por %p48, %p49
      %p51 = scmp.ne.s32.totalorder %s43, %s46
      %p52 = scmp.eq.s32.totalorder %s10, 0
      %p53 = por %p51, %p52
      %p54 = scmp.ne.s32.totalorder %s43, %s46
      %p55 = scmp.eq.s32.totalorder %s15, 1
      %p56 = por %p54, %p55
      %p57 = scmp.ne.s32.totalorder %s46, %s47
      %p58 = scmp.eq.s32.totalorder %s15, 0
      %p59 = por %p57, %p58
      %p60 = scmp.ne.s32.totalorder %s46, %s47
      %p61 = scmp.eq.s32.totalorder %s16, 1
      %p62 = por %p60, %p61
      %p64 = scmp.ne.s32.totalorder %s47, %s63
      %p65 = scmp.eq.s32.totalorder %s16, 0
      %p66 = por %p64, %p65
      %s67 = ssub.s32 %s17, %s36
      %p68 = scmp.eq.s32.totalorder %s67, 0
      %s70 = sadd.s32 %s69, 1
      %s71 = scalar_select %p68, %s69, %s70
      %p74 = pneg %p68
      %p75 = scmp.eq.s32.totalorder %s10, 1
      %p76 = por %p74, %p75
      %p77 = scmp.ne.s32.totalorder %s69, %s72
      %p78 = scmp.eq.s32.totalorder %s10, 0
      %p79 = por %p77, %p78
      %p80 = scmp.ne.s32.totalorder %s69, %s72
      %p81 = scmp.eq.s32.totalorder %s15, 1
      %p82 = por %p80, %p81
      %p83 = scmp.ne.s32.totalorder %s72, %s73
      %p84 = scmp.eq.s32.totalorder %s15, 0
      %p85 = por %p83, %p84
      %p86 = scmp.ne.s32.totalorder %s72, %s73
      %p87 = scmp.eq.s32.totalorder %s16, 1
      %p88 = por %p86, %p87
      %p90 = scmp.ne.s32.totalorder %s73, %s89
      %p91 = scmp.eq.s32.totalorder %s16, 0
      %p92 = por %p90, %p91
      %p93 = scmp.le.s32.totalorder 1, %s10
      %p94 = scmp.lt.s32.totalorder %s10, 3
      %p95 = pnand %p93, %p94
      %p96 = pneg %p95
      // Predicated region
      $region9: #{tpu_custom_call.1} parent=5 // pred_check
        _
      $region10: #{tpu_custom_call.1} parent=5 // pred_check_branch
        %98 = sbr.rel (%p95) target = $region12
      $region11: #{tpu_custom_call.1} parent=5 // pred_region
        %s99 = ssub.s32 %s10, 1
      $region12: #{tpu_custom_call.1} parent=5 // pred_fallthru
        _
      %p100 = scmp.lt.s32.totalorder %s10, 2
      // Predicated region
      $region13: #{tpu_custom_call.1} parent=5 // pred_check
        %p101 = pneg %p100
      $region14: #{tpu_custom_call.1} parent=5 // pred_check_branch
        %103 = sbr.rel (%p101) target = $region16
      $region15: #{tpu_custom_call.1} parent=5 // pred_region
        // Predicated region
        $region17: #{tpu_custom_call.1} parent=15 // pred_check
          %p104 = pneg %p53
        $region18: #{tpu_custom_call.1} parent=15 // pred_check_branch
          %106 = sbr.rel (%p104) target = $region20
        $region19: #{tpu_custom_call.1} parent=15 // pred_region
          %s107 = sand.u32 %s43, 1
          %s108 = scalar_lea.sflag [#allocation3], %s107
          %s109 = sand.u32 %s43, 1
          %s110 = smul.addr %s109, 96
          %s111 = scalar_lea.vmem [#allocation2], %s110
          %s112 = smul.u32 2, %s18
          %s113 = smul.u32 2, %s19
          %s115 = ssub.s32 1536, 1536
          %116 = vsyncadd %s108, %s115
          %s117 = smul.addr %s112, 6
          %s118 = sadd.s32 %s113, %s117
          %s119 = smul.addr %s17, 12
          %s120 = sadd.s32 %s118, %s119
          %s121 = smul.addr %s120, 128
          %s122 = scalar_lea.hbm %s0, %s121
          %s123 = sshll.u32 %s111, 4
          %s124 = int_to_ptr.vmem [resolvable:$true] %s123
          %129 = dma.hbm_to_vmem [thread:$0]  %s122, 1536, %s124, %s108, 256, 256, 16
        $region20: #{tpu_custom_call.1} parent=15 // pred_fallthru
          _
      $region16: #{tpu_custom_call.1} parent=5 // pred_fallthru
        _
      %p130 = scmp.le.s32.totalorder 1, %s10
      %p131 = scmp.lt.s32.totalorder %s10, 3
      %p132 = pnand %p130, %p131
      %p133 = pneg %p132
      // Predicated region
      $region21: #{tpu_custom_call.1} parent=5 // pred_check
        _
      $region22: #{tpu_custom_call.1} parent=5 // pred_check_branch
        %135 = sbr.rel (%p132) target = $region24
      $region23: #{tpu_custom_call.1} parent=5 // pred_region
        %s136 = ssub.s32 %s10, 1
        %s137 = sand.u32 %s46, 1
        %s138 = scalar_lea.sflag [#allocation3], %s137
        %s139 = sand.u32 %s46, 1
        %s140 = smul.addr %s139, 96
        %s141 = scalar_lea.vmem [#allocation2], %s140
        // Predicated region
        $region25: #{tpu_custom_call.1} parent=23 // pred_check
          %p142 = pneg %p59
        $region26: #{tpu_custom_call.1} parent=23 // pred_check_branch
          %144 = sbr.rel (%p142) target = $region28
        $region27: #{tpu_custom_call.1} parent=23 // pred_region
          %145 = dma.done %s138, 1536
        $region28: #{tpu_custom_call.1} parent=23 // pred_fallthru
          _
        %s146 = sand.u32 %s46, 1
        %s147 = scalar_lea.sflag [#allocation3], %s146
        %s148 = sand.u32 %s46, 1
        %s149 = smul.addr %s148, 96
        %s150 = scalar_lea.vmem [#allocation2], %s149
        %p151 = pneg %p59
        %p152 = pneg %p56
        %p153 = pneg %p85
        %p154 = pneg %p82
        %p155 = scmp.lt.s32.totalorder %s20, 1
        %s156 = scalar_select %p155, %s20, 1
        %s157 = smul.addr %s156, 3
        %s158 = smul.addr %s157, 8
        %s159 = scalar_lea.vmem %s1, %s158
        %s160 = smul.u32 2, %s21
        %s161 = smul.u32 2, %s22
        %p162 = scmp.lt.s32.totalorder %s20, 1
        %s163 = scalar_select %p162, %s20, 1
        %s164 = smul.addr %s163, 3
        %s165 = smul.addr %s164, 8
        %s166 = scalar_lea.vmem %s1, %s165
        %p167 = scmp.eq.s32.totalorder %s21, 0
        %p168 = scmp.eq.s32.totalorder %s22, 0
        %p169 = pnand %p167, %p168
        %p170 = pneg %p169
        // Predicated region
        $region29: #{tpu_custom_call.1} parent=23 // pred_check
          _
        $region30: #{tpu_custom_call.1} parent=23 // pred_check_branch
          %172 = sbr.rel (%p169) target = $region32
        $region31: #{tpu_custom_call.1} parent=23 // pred_region
          %vm173 = vcmask 7168
          %174 = vst.msk [vmem:[%s166] sm:$0xff] %vm173, 0.0
          %175 = vst.msk [vmem:[%s166 + $0x8] sm:$0xff] %vm173, 0.0
          %176 = vst.msk [vmem:[%s166 + $0x10] sm:$0xff] %vm173, 0.0
        $region32: #{tpu_custom_call.1} parent=23 // pred_fallthru
          _
        %v177 = vld [vmem:[%s141] sm:$0xff]
        %v178 = vld [vmem:[%s141 + $0x8] sm:$0xff]
        %v179 = vld [vmem:[%s141 + $0x10] sm:$0xff]
        %v180 = vld [vmem:[%s141 + $0x18] sm:$0xff]
        %v181 = vld [vmem:[%s141 + $0x20] sm:$0xff]
        %v182 = vld [vmem:[%s141 + $0x28] sm:$0xff]
        %v183 = vld [vmem:[%s141 + $0x30] sm:$0xff]
        %v184 = vld [vmem:[%s141 + $0x38] sm:$0xff]
        %v185 = vld [vmem:[%s141 + $0x40] sm:$0xff]
        %v186 = vld [vmem:[%s141 + $0x48] sm:$0xff]
        %v187 = vld [vmem:[%s141 + $0x50] sm:$0xff]
        %v188 = vld [vmem:[%s141 + $0x58] sm:$0xff]
        %vm189 = vcmp.ne.f32.partialorder %v177, %v177
        %vm190 = vcmp.ne.f32.partialorder %v178, %v178
        %vm191 = vcmp.ne.f32.partialorder %v179, %v179
        %vm192 = vcmp.ne.f32.partialorder %v180, %v180
        %vm193 = vcmp.ne.f32.partialorder %v181, %v181
        %vm194 = vcmp.ne.f32.partialorder %v182, %v182
        %vm195 = vcmp.ne.f32.partialorder %v183, %v183
        %vm196 = vcmp.ne.f32.partialorder %v184, %v184
        %vm197 = vcmp.ne.f32.partialorder %v185, %v185
        %vm198 = vcmp.ne.f32.partialorder %v186, %v186
        %vm199 = vcmp.ne.f32.partialorder %v187, %v187
        %vm200 = vcmp.ne.f32.partialorder %v188, %v188
        %v201 = vmul.f32 %v177, %v177
        %v202 = vmul.f32 %v178, %v178
        %v203 = vmul.f32 %v179, %v179
        %v204 = vmul.f32 %v180, %v180
        %v205 = vmul.f32 %v181, %v181
        %v206 = vmul.f32 %v182, %v182
        %v207 = vmul.f32 %v183, %v183
        %v208 = vmul.f32 %v184, %v184
        %v209 = vmul.f32 %v185, %v185
        %v210 = vmul.f32 %v186, %v186
        %v211 = vmul.f32 %v187, %v187
        %v212 = vmul.f32 %v188, %v188
        %v213 = vsel %vm189, 0.0, %v201
        %v214 = vsel %vm190, 0.0, %v202
        %v215 = vsel %vm191, 0.0, %v203
        %v216 = vsel %vm192, 0.0, %v204
        %v217 = vsel %vm193, 0.0, %v205
        %v218 = vsel %vm194, 0.0, %v206
        %v219 = vsel %vm195, 0.0, %v207
        %v220 = vsel %vm196, 0.0, %v208
        %v221 = vsel %vm197, 0.0, %v209
        %v222 = vsel %vm198, 0.0, %v210
        %v223 = vsel %vm199, 0.0, %v211
        %v224 = vsel %vm200, 0.0, %v212
        %v225 = vld [vmem:[%s166] sm:$0xff]
        %v226 = vld [vmem:[%s166 + $0x8] sm:$0xff]
        %v227 = vld [vmem:[%s166 + $0x10] sm:$0xff]
        %v228 = vadd.f32 %v213, %v214
        %v229 = vadd.f32 %v228, %v219
        %v230 = vadd.f32 %v229, %v220
        %231 = vadd.xlane.f32.xlu0 %v230
        %v232 = vpop.xlane.xlu0 %231
        %v233 = vadd.f32 %v215, %v216
        %v234 = vadd.f32 %v233, %v221
        %v235 = vadd.f32 %v234, %v222
        %236 = vadd.xlane.f32.xlu0 %v235
        %v237 = vpop.xlane.xlu0 %236
        %v238 = vadd.f32 %v217, %v218
        %v239 = vadd.f32 %v238, %v223
        %v240 = vadd.f32 %v239, %v224
        %241 = vadd.xlane.f32.xlu0 %v240
        %v242 = vpop.xlane.xlu0 %241
        %v243 = vadd.f32 %v225, %v232
        %v244 = vadd.f32 %v226, %v237
        %v245 = vadd.f32 %v227, %v242
        %vm246 = vcmask 7168
        %247 = vst.msk [vmem:[%s166] sm:$0xff] %vm246, %v243
        %248 = vst.msk [vmem:[%s166 + $0x8] sm:$0xff] %vm246, %v244
        %249 = vst.msk [vmem:[%s166 + $0x10] sm:$0xff] %vm246, %v245
        %p250 = scmp.lt.s32.totalorder %s20, 1
        %s251 = scalar_select %p250, %s20, 1
        %s252 = smul.addr %s251, 3
        %s253 = smul.addr %s252, 8
        %s254 = scalar_lea.vmem %s1, %s253
        // Predicated region
        $region33: #{tpu_custom_call.1} parent=23 // pred_check
          %p255 = pneg %p82
        $region34: #{tpu_custom_call.1} parent=23 // pred_check_branch
          %257 = sbr.rel (%p255) target = $region36
        $region35: #{tpu_custom_call.1} parent=23 // pred_region
          _
        $region36: #{tpu_custom_call.1} parent=23 // pred_fallthru
          _
      $region24: #{tpu_custom_call.1} parent=5 // pred_fallthru
        _
      %p258 = scmp.le.s32.totalorder 2, %s10
      // Predicated region
      $region37: #{tpu_custom_call.1} parent=5 // pred_check
        %p259 = pneg %p258
      $region38: #{tpu_custom_call.1} parent=5 // pred_check_branch
        %261 = sbr.rel (%p259) target = $region40
      $region39: #{tpu_custom_call.1} parent=5 // pred_region
        %s262 = ssub.s32 %s10, 2
        // Predicated region
        $region41: #{tpu_custom_call.1} parent=39 // pred_check
          %p263 = pneg %p88
        $region42: #{tpu_custom_call.1} parent=39 // pred_check_branch
          %265 = sbr.rel (%p263) target = $region44
        $region43: #{tpu_custom_call.1} parent=39 // pred_region
          %p266 = scmp.lt.s32.totalorder %s23, 1
          %s267 = scalar_select %p266, %s23, 1
          %s268 = smul.addr %s267, 3
          %s269 = smul.addr %s268, 8
          %s270 = scalar_lea.vmem %s1, %s269
        $region44: #{tpu_custom_call.1} parent=39 // pred_fallthru
          _
      $region40: #{tpu_custom_call.1} parent=5 // pred_fallthru
        _
    $region6: #{tpu_custom_call.1} parent=1 // loop_footer
      %s14 = sadd.s32 1, %s10
    $region7: #{tpu_custom_call.1} parent=1 // loop_footer_branch
      %9 = sbr.rel target = $region3
    $region8: #{tpu_custom_call.1} parent=1 // loop_exit
      _
    %271 = vsyncpa [#allocation3], 1
    %s272 = scalar_lea.sflag [#allocation3], 1
    %273 = vsyncpa %s272, 1

</llo_original>
